<compile_context>
chip_gen: v7x
topology: tpu7x:2x2x1
jax: 0.10.0
libtpu: 0.0.40
codegen_flags: <defaults>
</compile_context>

<pallas_src>
import jax
import jax.numpy as jnp
from jax.experimental import pallas as pl
from jax.experimental.pallas import tpu as pltpu

_LANE_W = 512          # lane-dense last dim (multiple of 128)
_MAX_TILE_ROWS = 1024  # 1024 * 512 * 4 B = 2 MiB per f32 block (fits v5e/v6e/v7x budgets)


def _powlog_kernel(a_ref, b_ref, x_ref, o_ref):
    # out = a + b * log(x); a, b are SMEM scalars.
    a = a_ref[0]
    b = b_ref[0]
    o_ref[...] = a + b * jnp.log(x_ref[...])


def _round_up(v, m):
    return ((v + m - 1) // m) * m


def powlog_forward(x, q, pow_param, log_param):
    """Pallas implementation of PowLogModel.forward for NCHW float input."""
    orig_shape = x.shape
    dtype = x.dtype
    n = x.size

    # Fold the scalar algebra once: one transcendental per element in-kernel
    # instead of ~6 (two pow(x, q) -> exp(q*log(x)) plus two logs).
    pow_s = jnp.asarray(pow_param, dtype=jnp.float32)
    log_s = jnp.asarray(log_param, dtype=jnp.float32)
    q_s = jnp.asarray(q, dtype=jnp.float32)
    a = (log_s * jnp.log(pow_s)).astype(dtype).reshape(1)  # logParam*log(powParam)
    b = (log_s * q_s).astype(dtype).reshape(1)             # logParam*q

    # Lane-dense layout: flatten, pad up to full (tile_rows, _LANE_W) tiles.
    rows = pl.cdiv(n, _LANE_W)
    tile_rows = min(_MAX_TILE_ROWS, _round_up(rows, 8))
    padded_rows = _round_up(rows, tile_rows)
    padded_n = padded_rows * _LANE_W

    x_flat = x.reshape(-1)
    if padded_n != n:
        # Pad with ones so log() stays finite in the (discarded) tail.
        x_flat = jnp.concatenate(
            [x_flat, jnp.ones((padded_n - n,), dtype=dtype)])
    x2d = x_flat.reshape(padded_rows, _LANE_W)

    grid = (padded_rows // tile_rows,)
    smem_spec = pl.BlockSpec(memory_space=pltpu.MemorySpace.SMEM)
    blk_spec = pl.BlockSpec((tile_rows, _LANE_W), lambda i: (i, 0))

    cost = pl.CostEstimate(
        flops=2 * padded_n,                                   # mul + add per element
        transcendentals=padded_n,                             # one log per element
        bytes_accessed=2 * padded_n * x2d.dtype.itemsize,     # f32 in + f32 out
    )

    out2d = pl.pallas_call(
        _powlog_kernel,
        out_shape=jax.ShapeDtypeStruct(x2d.shape, dtype),
        grid=grid,
        in_specs=[smem_spec, smem_spec, blk_spec],
        out_specs=blk_spec,
        compiler_params=pltpu.CompilerParams(
            dimension_semantics=("parallel",)),
        cost_estimate=cost,
    )(a, b, x2d)

    return out2d.reshape(-1)[:n].reshape(orig_shape)


if __name__ == "__main__":
    key = jax.random.PRNGKey(0)
    B, C, H, W = 2, 4, 16, 16
    # Positive inputs so log() is well defined (same requirement as torch.log).
    x = jax.random.uniform(key, (B, C, H, W), dtype=jnp.float32,
                           minval=0.1, maxval=2.0)
    q = 2.0

    # nn.Parameter(torch.tensor(1.0)) initialization for both sub-modules.
    pow_param = 1.0
    log_param = 1.0

    out = powlog_forward(x, q, pow_param, log_param)
    out = jax.block_until_ready(out)

    # Reference in plain JAX (same math as the PyTorch module, un-simplified).
    y = pow_param * jnp.power(x, q)
    ref = (log_param * jnp.log(y) + log_param * jnp.log(y)) / 2
    assert out.shape == ref.shape
    assert jnp.allclose(out, ref, atol=1e-5, rtol=1e-5)

    print("KERNEL_OK")
</pallas_src>

<mosaic_0001>
module attributes {stable_mosaic.version = 11 : i64} {
  func.func @_powlog_kernel(%arg0: i32, %arg1: memref<1xf32, #tpu.memory_space<smem>>, %arg2: memref<1xf32, #tpu.memory_space<smem>>, %arg3: memref<8x512xf32, #tpu.memory_space<vmem>>, %arg4: memref<8x512xf32, #tpu.memory_space<vmem>>) attributes {dimension_semantics = [#tpu.dimension_semantics<parallel>], iteration_bounds = array<i64: 1>, scalar_prefetch = 0 : i64, scratch_operands = 0 : i64, tpu.core_type = #tpu.core_type<tc>, window_params = [{transform_indices = @transform_0, window_bounds = array<i64: 1>}, {transform_indices = @transform_1, window_bounds = array<i64: 1>}, {transform_indices = @transform_2, window_bounds = array<i64: 8, 512>}, {transform_indices = @transform_3, window_bounds = array<i64: 8, 512>}]} {
    %c0 = arith.constant 0 : index
    %0 = memref.load %arg1[%c0] : memref<1xf32, #tpu.memory_space<smem>>
    %c0_0 = arith.constant 0 : index
    %1 = memref.load %arg2[%c0_0] : memref<1xf32, #tpu.memory_space<smem>>
    %c0_1 = arith.constant 0 : index
    %c0_2 = arith.constant 0 : index
    %2 = vector.load %arg3[%c0_1, %c0_2] : memref<8x512xf32, #tpu.memory_space<vmem>>, vector<8x512xf32>
    %3 = math.log %2 : vector<8x512xf32>
    %4 = vector.broadcast %1 : f32 to vector<8x512xf32>
    %5 = arith.mulf %4, %3 : vector<8x512xf32>
    %6 = vector.broadcast %0 : f32 to vector<8x512xf32>
    %7 = arith.addf %6, %5 : vector<8x512xf32>
    %c0_3 = arith.constant 0 : index
    %c0_4 = arith.constant 0 : index
    %8 = vector.load %arg4[%c0_3, %c0_4] : memref<8x512xf32, #tpu.memory_space<vmem>>, vector<8x512xf32>
    tpu.vector_store %arg4[%c0_3, %c0_4], %7 {strides = array<i32>} : memref<8x512xf32, #tpu.memory_space<vmem>>, vector<8x512xf32>,
    return
  }
  func.func @transform_0(%arg0: i32) -> i32 {
    %c0_i32 = arith.constant 0 : i32
    %c0_i32_0 = arith.constant 0 : i32
    return %c0_i32 : i32
  }
  func.func @transform_1(%arg0: i32) -> i32 {
    %c0_i32 = arith.constant 0 : i32
    %c0_i32_0 = arith.constant 0 : i32
    return %c0_i32 : i32
  }
  func.func @transform_2(%arg0: i32) -> (i32, i32) {
    %c0_i32 = arith.constant 0 : i32
    %c0_i32_0 = arith.constant 0 : i32
    return %arg0, %c0_i32 : i32, i32
  }
  func.func @transform_3(%arg0: i32) -> (i32, i32) {
    %c0_i32 = arith.constant 0 : i32
    %c0_i32_0 = arith.constant 0 : i32
    return %arg0, %c0_i32 : i32, i32
  }
}

</mosaic_0001>

<llo_original>
// kernel: tpu_custom_call.1
$region0: #{tpu_custom_call.1}
  #allocation0 [shape = 'u32[]', space=smem, size = 0x4, offset = 0x4, fixed_abs, tag = 'smem constant byte address 0x4 - core index']
  #allocation1 [shape = 'u32[144,128]{1,0:T(1,128)}', space=vmem, size = 0x12000, scoped, tag = 'internal scratch']
  #allocation2 [shape = 'f32[1]{0:T(128)S(6)}', space=smem, size = 0x200, scoped, tag = 'scoped memory for tpu_custom_call.1']
  #allocation3 [shape = 'f32[1]{0:T(128)S(6)}', space=smem, size = 0x200, scoped, tag = 'scoped memory for tpu_custom_call.1']
  %s0 = inlined_call_operand.<no memory space> [shape: f32[1], index: 0, kind: input, shape index: {}]
  %s1 = inlined_call_operand.<no memory space> [shape: f32[1], index: 1, kind: input, shape index: {}]
  %s2 = inlined_call_operand.hbm [shape: f32[8,512], index: 2, kind: input, shape index: {}]
  %s3 = inlined_call_operand.hbm [shape: f32[8,512], index: 3, kind: output, shape index: {}]
  %s4 = sld [smem:[#allocation0]]
  $region26: #{tpu_custom_call.1} parent=0
    _
  %s6 = ssub.s32 1, %s4
  %s7 = scalar_select 0, %s6, %s4
  %8 = sst [smem:[#allocation2]] %s0
  %9 = sst [smem:[#allocation3]] %s1
  $region1: #{tpu_custom_call.1} parent=0
    #allocation4 [shape = 'u8[16384]{0}', space=vmem, size = 0x4000, scoped, tag = 'input window, operand 2, single buffered']
    #allocation5 [shape = 's32[1]{0}', space=sflag, size = 0x4, scoped, tag = 'scoped memory for tpu_custom_call.1']
    #allocation6 [shape = 's32[1]{0}', space=sflag, size = 0x4, scoped, tag = 'scoped memory for tpu_custom_call.1']
    #allocation7 [shape = 'u8[16384]{0}', space=vmem, size = 0x4000, scoped, tag = 'output window, operand 0, single buffered']
    %10 = vsyncpa [#allocation5], 0
    %11 = vsyncpa [#allocation6], 0
    // Predicated region
    $region2: #{tpu_custom_call.1} parent=1 // pred_check
      _
    $region3: #{tpu_custom_call.1} parent=1 // pred_check_branch
      %13 = sbr.rel (0) target = $region5
    $region4: #{tpu_custom_call.1} parent=1 // pred_region
      _
    $region5: #{tpu_custom_call.1} parent=1 // pred_fallthru
      _
    // Predicated region
    $region6: #{tpu_custom_call.1} parent=1 // pred_check
      _
    $region7: #{tpu_custom_call.1} parent=1 // pred_check_branch
      %15 = sbr.rel (0) target = $region9
    $region8: #{tpu_custom_call.1} parent=1 // pred_region
      _
    $region9: #{tpu_custom_call.1} parent=1 // pred_fallthru
      _
    // Predicated region
    $region10: #{tpu_custom_call.1} parent=1 // pred_check
      _
    $region11: #{tpu_custom_call.1} parent=1 // pred_check_branch
      %17 = sbr.rel (0) target = $region13
    $region12: #{tpu_custom_call.1} parent=1 // pred_region
      %s19 = ssub.s32 512, 512
      %20 = vsyncadd [#allocation5], %s19
      %s22 = sshll.u32 [#allocation4], 4
      %s23 = int_to_ptr.vmem [resolvable:$true] %s22
      %25 = dma.hbm_to_vmem [thread:$0]  %s2, 512, %s23, [#allocation5]
    $region13: #{tpu_custom_call.1} parent=1 // pred_fallthru
      _
    // Predicated region
    $region14: #{tpu_custom_call.1} parent=1 // pred_check
      _
    $region15: #{tpu_custom_call.1} parent=1 // pred_check_branch
      %27 = sbr.rel (0) target = $region17
    $region16: #{tpu_custom_call.1} parent=1 // pred_region
      %28 = dma.done [#allocation5], 512
    $region17: #{tpu_custom_call.1} parent=1 // pred_fallthru
      _
    %s29 = sld [smem:[#allocation2]]
    %s30 = sld [smem:[#allocation3]]
    %v31 = vld [vmem:[#allocation4] sm:$0xff]
    %v32 = vld [vmem:[#allocation4 + $0x8] sm:$0xff]
    %v33 = vld [vmem:[#allocation4 + $0x10] sm:$0xff]
    %v34 = vld [vmem:[#allocation4 + $0x18] sm:$0xff]
    %v35 = vlog2.pop %v31
    %v36 = vmul.f32 %v35, 0.6931472
    %v37 = vlog2.pop %v32
    %v38 = vmul.f32 %v37, 0.6931472
    %v39 = vlog2.pop %v33
    %v40 = vmul.f32 %v39, 0.6931472
    %v41 = vlog2.pop %v34
    %v42 = vmul.f32 %v41, 0.6931472
    %v43 = vstv %s30
    %v44 = vmul.f32 %v43, %v36
    %v45 = vmul.f32 %v43, %v38
    %v46 = vmul.f32 %v43, %v40
    %v47 = vmul.f32 %v43, %v42
    %v48 = vstv %s29
    %v49 = vadd.f32 %v48, %v44
    %v50 = vadd.f32 %v48, %v45
    %v51 = vadd.f32 %v48, %v46
    %v52 = vadd.f32 %v48, %v47
    %53 = vst [vmem:[#allocation7] sm:$0xff] %v49
    %54 = vst [vmem:[#allocation7 + $0x8] sm:$0xff] %v50
    %55 = vst [vmem:[#allocation7 + $0x10] sm:$0xff] %v51
    %56 = vst [vmem:[#allocation7 + $0x18] sm:$0xff] %v52
    // Predicated region
    $region18: #{tpu_custom_call.1} parent=1 // pred_check
      _
    $region19: #{tpu_custom_call.1} parent=1 // pred_check_branch
      %58 = sbr.rel (0) target = $region21
    $region20: #{tpu_custom_call.1} parent=1 // pred_region
      %s60 = ssub.s32 512, 512
      %61 = vsyncadd [#allocation6], %s60
      %s63 = sshll.u32 [#allocation7], 4
      %s64 = int_to_ptr.vmem [resolvable:$true] %s63
      %66 = dma.vmem_to_hbm [thread:$0]  %s64, 512, %s3, [#allocation6]
    $region21: #{tpu_custom_call.1} parent=1 // pred_fallthru
      _
    // Predicated region
    $region22: #{tpu_custom_call.1} parent=1 // pred_check
      _
    $region23: #{tpu_custom_call.1} parent=1 // pred_check_branch
      %68 = sbr.rel (0) target = $region25
    $region24: #{tpu_custom_call.1} parent=1 // pred_region
      %69 = dma.done [#allocation6], 512
    $region25: #{tpu_custom_call.1} parent=1 // pred_fallthru
      _
    %70 = vsyncpa [#allocation5], 1
    %71 = vsyncpa [#allocation6], 1

</llo_original>
